<compile_context>
chip_gen: v6e
topology: v6e:2x2x1
jax: 0.10.0
libtpu: 0.0.40
codegen_flags: <defaults>
</compile_context>

<pallas_src>
import jax
import jax.numpy as jnp
from jax.experimental import pallas as pl
from jax.experimental.pallas import tpu as pltpu


def _round_up(x, m):
    return ((x + m - 1) // m) * m


def _sublane(itemsize):
    return {4: 8, 2: 16, 1: 32}.get(itemsize, 8)


def _padded2d_bytes(rows, cols, itemsize):
    return (_round_up(max(rows, 1), _sublane(itemsize))
            * _round_up(max(cols, 1), 128) * itemsize)


def _vmem_capacity_bytes(default=64 * 1024 * 1024):
    # Trace-time query of the running chip; fall back to the smallest
    # per-generation VMEM (v7x: 64 MiB) so derived tiles are safe everywhere.
    try:
        return int(pltpu.get_tpu_info().vmem_capacity_bytes)
    except Exception:
        return default


def _choose_tiles(B, C, HW, itemsize, max_block_bytes):
    """Pick (tb, hw_chunk) for the (tb, C, hw_chunk) x block using padded bytes."""
    c_pad = _round_up(C, _sublane(itemsize))
    hw_pad_full = _round_up(HW, 128)
    tb_min = B if B <= 8 else 8          # output block second-minor must be %8 or == B

    # Spatial chunk: full HW if tb_min rows fit the budget, otherwise the
    # largest multiple of 128 that does (>= 128 keeps the block lane-legal).
    per_row_elems = max(1, max_block_bytes // (tb_min * c_pad * itemsize))
    if per_row_elems >= hw_pad_full:
        hw_chunk = HW
    else:
        hw_chunk = min(max(128, (per_row_elems // 128) * 128), hw_pad_full)
        if hw_chunk >= HW:
            hw_chunk = HW

    row_bytes = c_pad * _round_up(hw_chunk, 128) * itemsize
    if B <= 8:
        tb = B
    else:
        tb = max(8, (min(max(1, max_block_bytes // row_bytes), B) // 8) * 8)
        if B >= 16:
            # Keep >= 2 batch blocks so v7x's second TensorCore gets work.
            tb = min(tb, _round_up(-(-B // 2), 8))
    return tb, hw_chunk


def feature_classify(x, weight, bias, *, max_block_bytes=None):
    """AdaptiveAvgPool2d(1) + squeeze + Linear.

    x: (B, C, H, W) NCHW.  weight: (num_classes, C).  bias: (num_classes,).
    """
    B, C, H, W = x.shape
    N = weight.shape[0]
    HW = H * W
    Npad = _round_up(N, 128)             # lane-dense (unmasked) output stores
    itemsize = jnp.dtype(x.dtype).itemsize

    vmem_cap = _vmem_capacity_bytes()
    usable = max(8 << 20, vmem_cap - (16 << 20))
    if max_block_bytes is None:
        # x is double-buffered; leave ~half of usable VMEM for everything else.
        max_block_bytes = min(24 << 20, max(4 << 20, usable // 4))

    tb, hw_chunk = _choose_tiles(B, C, HW, itemsize, max_block_bytes)
    grid = (pl.cdiv(B, tb), pl.cdiv(HW, hw_chunk))
    needs_hw_mask = (hw_chunk < HW) and (HW % hw_chunk != 0)

    x3 = x.reshape(B, C, HW)              # contiguous view, no data movement

    # Weight: transposed + class-padded.  Keep f32 unless it is large enough to
    # pressure VMEM (it is double-buffered), in which case ship it in x.dtype.
    # 1/HW is applied as a separate f32 scalar in the finalize so the scale is
    # never quantized by a low-precision weight.
    w_dtype = jnp.float32 if C * Npad * 4 <= (2 << 20) else x.dtype
    wt = jnp.zeros((C, Npad), w_dtype).at[:, :N].set(weight.T.astype(w_dtype))
    b2 = jnp.zeros((1, Npad), jnp.float32).at[:, :N].set(bias.astype(jnp.float32))
    inv_hw = float(1.0 / HW)
    small_c = C <= 16

    def kernel(x_ref, w_ref, b_ref, o_ref, acc_ref):
        hw_i = pl.program_id(1)

        @pl.when(hw_i == 0)
        def _init():
            acc_ref[...] = jnp.zeros_like(acc_ref)

        xv = x_ref[...]
        if needs_hw_mask:
            pos = hw_i * hw_chunk + jax.lax.broadcasted_iota(jnp.int32, xv.shape, 2)
            xv = jnp.where(pos < HW, xv, jnp.zeros_like(xv))
        # Partial spatial sum, accumulated in f32 (no full-tile f32 copy of x).
        # TODO(synk): a lane-shaped (tb, C, 128) accumulator with one XLU reduce
        # in the finalize would keep the inner loop VPU-only (v7x micro-opt).
        acc_ref[...] += jnp.sum(xv, axis=-1, dtype=jnp.float32)

        @pl.when(hw_i == pl.num_programs(1) - 1)
        def _finalize():
            pooled = acc_ref[...] * jnp.float32(inv_hw)     # (tb, C) f32 mean
            w = w_ref[...].astype(jnp.float32)              # (C, Npad)
            bias_v = b_ref[...].astype(jnp.float32)         # (1, Npad)
            if small_c:
                # Tiny contraction: VPU broadcast-MACs beat a near-empty MXU pass.
                out = jnp.broadcast_to(bias_v, (pooled.shape[0], w.shape[1]))
                for c in range(w.shape[0]):
                    out = out + pooled[:, c:c + 1] * w[c:c + 1, :]
            else:
                out = jnp.dot(pooled, w, preferred_element_type=jnp.float32) + bias_v
            o_ref[...] = out.astype(o_ref.dtype)

    # Padded-byte VMEM accounting (double buffers included) for the scoped limit.
    x_blk_bytes = (tb * _round_up(C, _sublane(itemsize))
                   * _round_up(hw_chunk, 128) * itemsize)
    need = (2 * x_blk_bytes
            + 2 * _padded2d_bytes(C, Npad, jnp.dtype(w_dtype).itemsize)
            + 2 * _padded2d_bytes(1, Npad, 4)
            + 2 * _padded2d_bytes(tb, Npad, itemsize)
            + _padded2d_bytes(tb, C, 4)
            + (2 << 20))                                     # compiler slack
    vmem_limit = int(min(vmem_cap - (8 << 20), max(32 << 20, need + (4 << 20))))

    cost = pl.CostEstimate(
        flops=B * C * HW + 2 * B * C * Npad,
        transcendentals=0,
        bytes_accessed=(x3.size * itemsize
                        + wt.size * jnp.dtype(w_dtype).itemsize
                        + b2.size * 4 + B * Npad * itemsize),
    )

    out = pl.pallas_call(
        kernel,
        out_shape=jax.ShapeDtypeStruct((B, Npad), x.dtype),
        grid_spec=pltpu.PrefetchScalarGridSpec(
            num_scalar_prefetch=0,
            grid=grid,
            in_specs=[
                pl.BlockSpec((tb, C, hw_chunk), lambda bi, si: (bi, 0, si)),
                pl.BlockSpec((C, Npad), lambda bi, si: (0, 0)),
                pl.BlockSpec((1, Npad), lambda bi, si: (0, 0)),
            ],
            out_specs=pl.BlockSpec((tb, Npad), lambda bi, si: (bi, 0)),
            scratch_shapes=[pltpu.VMEM((tb, C), jnp.float32)],
        ),
        compiler_params=pltpu.CompilerParams(
            dimension_semantics=("parallel", "arbitrary"),
            vmem_limit_bytes=vmem_limit,
        ),
        cost_estimate=cost,
    )(x3, wt, b2)

    out = out[:, :N]
    if B == 1:
        out = out[0]        # match torch's x.squeeze() dropping the batch dim
    return out


if __name__ == "__main__":
    key = jax.random.PRNGKey(0)

    def ref_fn(x, w, b):
        pooled = jnp.mean(x.astype(jnp.float32), axis=(2, 3))
        return pooled @ w.astype(jnp.float32).T + b.astype(jnp.float32)

    def make_case(k, B, C, H, W, N, dtype):
        kx, kw, kb = jax.random.split(k, 3)
        x = jax.random.normal(kx, (B, C, H, W), jnp.float32).astype(dtype)
        bound = 1.0 / (C ** 0.5)
        w = jax.random.uniform(kw, (N, C), jnp.float32, -bound, bound)
        b = jax.random.uniform(kb, (N,), jnp.float32, -bound, bound)
        return x, w, b

    keys = jax.random.split(key, 5)

    # 1) Spec demo shape (single-block grid), tiny C -> VPU linear path.
    x, w, b = make_case(keys[0], 2, 4, 16, 16, 10, jnp.float32)
    out = jax.block_until_ready(feature_classify(x, w, b))
    assert out.shape == (2, 10)
    assert jnp.allclose(out, ref_fn(x, w, b), atol=1e-5, rtol=1e-5)

    # 2) Batch-tiled grid (2 batch blocks) and MXU dot path (C > 16).
    x, w, b = make_case(keys[1], 16, 32, 16, 16, 10, jnp.float32)
    out = jax.block_until_ready(feature_classify(x, w, b, max_block_bytes=256 * 1024))
    assert out.shape == (16, 10)
    assert jnp.allclose(out, ref_fn(x, w, b), atol=1e-5, rtol=1e-5)

    # 3) Spatial (HW) accumulation across many grid steps + bf16 input (f32 accumulate).
    x, w, b = make_case(keys[2], 4, 8, 32, 64, 10, jnp.bfloat16)
    out = jax.block_until_ready(feature_classify(x, w, b, max_block_bytes=16 * 1024))
    assert out.shape == (4, 10)
    assert jnp.allclose(out.astype(jnp.float32), ref_fn(x, w, b), atol=5e-2, rtol=5e-2)

    # 4) B == 1 follows torch's x.squeeze(): rank-1 output.
    x, w, b = make_case(keys[3], 1, 4, 8, 8, 10, jnp.float32)
    out = jax.block_until_ready(feature_classify(x, w, b))
    assert out.shape == (10,)
    assert jnp.allclose(out, ref_fn(x, w, b)[0], atol=1e-5, rtol=1e-5)

    # 5) HW not divisible by the 128-multiple hw_chunk -> in-kernel spatial tail mask.
    x, w, b = make_case(keys[4], 4, 64, 10, 20, 10, jnp.float32)
    out = jax.block_until_ready(feature_classify(x, w, b, max_block_bytes=64 * 1024))
    assert out.shape == (4, 10)
    assert jnp.allclose(out, ref_fn(x, w, b), atol=1e-4, rtol=1e-4)

    print("KERNEL_OK")
</pallas_src>

<mosaic_0001>
module attributes {stable_mosaic.version = 11 : i64} {
  func.func @kernel(%arg0: i32, %arg1: i32, %arg2: memref<2x4x256xf32, #tpu.memory_space<vmem>>, %arg3: memref<4x128xf32, #tpu.memory_space<vmem>>, %arg4: memref<1x128xf32, #tpu.memory_space<vmem>>, %arg5: memref<2x128xf32, #tpu.memory_space<vmem>>, %arg6: memref<2x4xf32, #tpu.memory_space<vmem>>) attributes {dimension_semantics = [#tpu.dimension_semantics<parallel>, #tpu.dimension_semantics<arbitrary>], iteration_bounds = array<i64: 1, 1>, scalar_prefetch = 0 : i64, scratch_operands = 1 : i64, tpu.core_type = #tpu.core_type<tc>, window_params = [{transform_indices = @transform_0, window_bounds = array<i64: 2, 4, 256>}, {pipeline_mode = #tpu.pipeline_mode<synchronous>, transform_indices = @transform_1, window_bounds = array<i64: 4, 128>}, {pipeline_mode = #tpu.pipeline_mode<synchronous>, transform_indices = @transform_2, window_bounds = array<i64: 1, 128>}, {transform_indices = @transform_3, window_bounds = array<i64: 2, 128>}]} {
    %c0_i32 = arith.constant 0 : i32
    %0 = arith.cmpi eq, %arg1, %c0_i32 : i32
    %1 = arith.extui %0 : i1 to i32
    %c0_i32_0 = arith.constant 0 : i32
    %2 = arith.cmpi ne, %1, %c0_i32_0 : i32
    scf.if %2 {
      %cst_9 = arith.constant 0.000000e+00 : f32
      %11 = vector.broadcast %cst_9 : f32 to vector<2x4xf32>
      %c0_10 = arith.constant 0 : index
      %c0_11 = arith.constant 0 : index
      %12 = vector.load %arg6[%c0_10, %c0_11] : memref<2x4xf32, #tpu.memory_space<vmem>>, vector<2x4xf32>
      tpu.vector_store %arg6[%c0_10, %c0_11], %11 {strides = array<i32>} : memref<2x4xf32, #tpu.memory_space<vmem>>, vector<2x4xf32>,
    } else {
    }
    %c0 = arith.constant 0 : index
    %c0_1 = arith.constant 0 : index
    %c0_2 = arith.constant 0 : index
    %3 = vector.load %arg2[%c0, %c0_1, %c0_2] : memref<2x4x256xf32, #tpu.memory_space<vmem>>, vector<2x4x256xf32>
    %c0_3 = arith.constant 0 : index
    %c0_4 = arith.constant 0 : index
    %4 = vector.load %arg6[%c0_3, %c0_4] : memref<2x4xf32, #tpu.memory_space<vmem>>, vector<2x4xf32>
    %cst = arith.constant dense<0.000000e+00> : vector<2x4xf32>
    %5 = vector.multi_reduction <add>, %3, %cst [2] : vector<2x4x256xf32> to vector<2x4xf32>
    %6 = arith.addf %4, %5 : vector<2x4xf32>
    %c0_5 = arith.constant 0 : index
    %c0_6 = arith.constant 0 : index
    %7 = vector.load %arg6[%c0_5, %c0_6] : memref<2x4xf32, #tpu.memory_space<vmem>>, vector<2x4xf32>
    tpu.vector_store %arg6[%c0_5, %c0_6], %6 {strides = array<i32>} : memref<2x4xf32, #tpu.memory_space<vmem>>, vector<2x4xf32>,
    %c0_i32_7 = arith.constant 0 : i32
    %8 = arith.cmpi eq, %arg1, %c0_i32_7 : i32
    %9 = arith.extui %8 : i1 to i32
    %c0_i32_8 = arith.constant 0 : i32
    %10 = arith.cmpi ne, %9, %c0_i32_8 : i32
    scf.if %10 {
      %c0_9 = arith.constant 0 : index
      %c0_10 = arith.constant 0 : index
      %11 = vector.load %arg6[%c0_9, %c0_10] : memref<2x4xf32, #tpu.memory_space<vmem>>, vector<2x4xf32>
      %cst_11 = arith.constant 3.906250e-03 : f32
      %12 = vector.broadcast %cst_11 : f32 to vector<2x4xf32>
      %13 = arith.mulf %11, %12 : vector<2x4xf32>
      %c0_12 = arith.constant 0 : index
      %c0_13 = arith.constant 0 : index
      %14 = vector.load %arg3[%c0_12, %c0_13] : memref<4x128xf32, #tpu.memory_space<vmem>>, vector<4x128xf32>
      %c0_14 = arith.constant 0 : index
      %c0_15 = arith.constant 0 : index
      %15 = vector.load %arg4[%c0_14, %c0_15] : memref<1x128xf32, #tpu.memory_space<vmem>>, vector<1x128xf32>
      %16 = vector.shape_cast %15 : vector<1x128xf32> to vector<1x128xf32>
      %17 = vector.broadcast %16 : vector<1x128xf32> to vector<2x128xf32>
      %18 = vector.extract_strided_slice %13 {offsets = [0, 0], sizes = [2, 1], strides = [1, 1]} : vector<2x4xf32> to vector<2x1xf32>
      %19 = vector.extract_strided_slice %14 {offsets = [0, 0], sizes = [1, 128], strides = [1, 1]} : vector<4x128xf32> to vector<1x128xf32>
      %20 = vector.broadcast %18 : vector<2x1xf32> to vector<2x128xf32>
      %21 = vector.broadcast %19 : vector<1x128xf32> to vector<2x128xf32>
      %22 = arith.mulf %20, %21 : vector<2x128xf32>
      %23 = arith.addf %17, %22 : vector<2x128xf32>
      %24 = vector.extract_strided_slice %13 {offsets = [0, 1], sizes = [2, 1], strides = [1, 1]} : vector<2x4xf32> to vector<2x1xf32>
      %25 = vector.extract_strided_slice %14 {offsets = [1, 0], sizes = [1, 128], strides = [1, 1]} : vector<4x128xf32> to vector<1x128xf32>
      %26 = vector.broadcast %24 : vector<2x1xf32> to vector<2x128xf32>
      %27 = vector.broadcast %25 : vector<1x128xf32> to vector<2x128xf32>
      %28 = arith.mulf %26, %27 : vector<2x128xf32>
      %29 = arith.addf %23, %28 : vector<2x128xf32>
      %30 = vector.extract_strided_slice %13 {offsets = [0, 2], sizes = [2, 1], strides = [1, 1]} : vector<2x4xf32> to vector<2x1xf32>
      %31 = vector.extract_strided_slice %14 {offsets = [2, 0], sizes = [1, 128], strides = [1, 1]} : vector<4x128xf32> to vector<1x128xf32>
      %32 = vector.broadcast %30 : vector<2x1xf32> to vector<2x128xf32>
      %33 = vector.broadcast %31 : vector<1x128xf32> to vector<2x128xf32>
      %34 = arith.mulf %32, %33 : vector<2x128xf32>
      %35 = arith.addf %29, %34 : vector<2x128xf32>
      %36 = vector.extract_strided_slice %13 {offsets = [0, 3], sizes = [2, 1], strides = [1, 1]} : vector<2x4xf32> to vector<2x1xf32>
      %37 = vector.extract_strided_slice %14 {offsets = [3, 0], sizes = [1, 128], strides = [1, 1]} : vector<4x128xf32> to vector<1x128xf32>
      %38 = vector.broadcast %36 : vector<2x1xf32> to vector<2x128xf32>
      %39 = vector.broadcast %37 : vector<1x128xf32> to vector<2x128xf32>
      %40 = arith.mulf %38, %39 : vector<2x128xf32>
      %41 = arith.addf %35, %40 : vector<2x128xf32>
      %c0_16 = arith.constant 0 : index
      %c0_17 = arith.constant 0 : index
      %42 = vector.load %arg5[%c0_16, %c0_17] : memref<2x128xf32, #tpu.memory_space<vmem>>, vector<2x128xf32>
      tpu.vector_store %arg5[%c0_16, %c0_17], %41 {strides = array<i32>} : memref<2x128xf32, #tpu.memory_space<vmem>>, vector<2x128xf32>,
    } else {
    }
    return
  }
  func.func @transform_0(%arg0: i32, %arg1: i32) -> (i32, i32, i32) {
    %c0_i32 = arith.constant 0 : i32
    %c0_i32_0 = arith.constant 0 : i32
    return %arg0, %c0_i32, %arg1 : i32, i32, i32
  }
  func.func @transform_1(%arg0: i32, %arg1: i32) -> (i32, i32) {
    %c0_i32 = arith.constant 0 : i32
    %c0_i32_0 = arith.constant 0 : i32
    %c0_i32_1 = arith.constant 0 : i32
    return %c0_i32, %c0_i32_0 : i32, i32
  }
  func.func @transform_2(%arg0: i32, %arg1: i32) -> (i32, i32) {
    %c0_i32 = arith.constant 0 : i32
    %c0_i32_0 = arith.constant 0 : i32
    %c0_i32_1 = arith.constant 0 : i32
    return %c0_i32, %c0_i32_0 : i32, i32
  }
  func.func @transform_3(%arg0: i32, %arg1: i32) -> (i32, i32) {
    %c0_i32 = arith.constant 0 : i32
    %c0_i32_0 = arith.constant 0 : i32
    return %arg0, %c0_i32 : i32, i32
  }
}

</mosaic_0001>

<llo_original>
// kernel: tpu_custom_call.1
$region0: #{tpu_custom_call.1}
  #allocation0 [shape = 'u32[]', space=smem, size = 0x4, offset = 0x4, fixed_abs, tag = 'smem constant byte address 0x4 - core index']
  #allocation1 [shape = 'u32[144,128]{1,0:T(1,128)}', space=vmem, size = 0x12000, scoped, tag = 'internal scratch']
  #allocation2 [shape = 'f32[2,4]{1,0:T(2,128)}', space=vmem, size = 0x400, scoped, tag = 'scratch operand']
  %s0 = inlined_call_operand.hbm [shape: f32[2,4,256], index: 0, kind: input, shape index: {}]
  %s1 = inlined_call_operand.hbm [shape: f32[4,128], index: 1, kind: input, shape index: {}]
  %s2 = inlined_call_operand.vmem [shape: f32[1,128], index: 2, kind: input, shape index: {}]
  %s3 = inlined_call_operand.hbm [shape: f32[2,128], index: 3, kind: output, shape index: {}]
  %s4 = sld [smem:[#allocation0]]
  $region38: #{tpu_custom_call.1} parent=0
    _
  %s6 = ssub.s32 1, %s4
  %s7 = scalar_select 0, %s6, %s4
  $region1: #{tpu_custom_call.1} parent=0
    #allocation3 [shape = 'u8[8192]{0}', space=vmem, size = 0x2000, scoped, tag = 'input window, operand 0, single buffered']
    #allocation4 [shape = 's32[1]{0}', space=sflag, size = 0x4, scoped, tag = 'scoped memory for tpu_custom_call.1']
    #allocation5 [shape = 's32[1]{0}', space=sflag, size = 0x4, scoped, tag = 'scoped memory for tpu_custom_call.1']
    #allocation6 [shape = 'u8[2048]{0}', space=vmem, size = 0x800, scoped, tag = 'input window, operand 1, single buffered']
    #allocation7 [shape = 's32[1]{0}', space=sflag, size = 0x4, scoped, tag = 'scoped memory for tpu_custom_call.1']
    #allocation8 [shape = 'u8[1024]{0}', space=vmem, size = 0x400, scoped, tag = 'output window, operand 0, single buffered']
    %8 = vsyncpa [#allocation4], 0
    %9 = vsyncpa [#allocation7], 0
    %10 = vsyncpa [#allocation5], 0
    // Predicated region
    $region2: #{tpu_custom_call.1} parent=1 // pred_check
      _
    $region3: #{tpu_custom_call.1} parent=1 // pred_check_branch
      %12 = sbr.rel (0) target = $region5
    $region4: #{tpu_custom_call.1} parent=1 // pred_region
      %s14 = ssub.s32 256, 256
      %15 = vsyncadd [#allocation4], %s14
      %s16 = sshll.u32 [#allocation3], 4
      %s17 = int_to_ptr.vmem [resolvable:$true] %s16
      %22 = dma.hbm_to_vmem [thread:$0]  %s0, 256, %s17, [#allocation4], 128, 128, 8
    $region5: #{tpu_custom_call.1} parent=1 // pred_fallthru
      _
    // Predicated region
    $region6: #{tpu_custom_call.1} parent=1 // pred_check
      _
    $region7: #{tpu_custom_call.1} parent=1 // pred_check_branch
      %24 = sbr.rel (0) target = $region9
    $region8: #{tpu_custom_call.1} parent=1 // pred_region
      %s26 = ssub.s32 64, 64
      %27 = vsyncadd [#allocation7], %s26
      %s29 = sshll.u32 [#allocation6], 4
      %s30 = int_to_ptr.vmem [resolvable:$true] %s29
      %32 = dma.hbm_to_vmem [thread:$0]  %s1, 64, %s30, [#allocation7]
    $region9: #{tpu_custom_call.1} parent=1 // pred_fallthru
      _
    // Predicated region
    $region10: #{tpu_custom_call.1} parent=1 // pred_check
      _
    $region11: #{tpu_custom_call.1} parent=1 // pred_check_branch
      %34 = sbr.rel (0) target = $region13
    $region12: #{tpu_custom_call.1} parent=1 // pred_region
      _
    $region13: #{tpu_custom_call.1} parent=1 // pred_fallthru
      _
    // Predicated region
    $region14: #{tpu_custom_call.1} parent=1 // pred_check
      _
    $region15: #{tpu_custom_call.1} parent=1 // pred_check_branch
      %36 = sbr.rel (0) target = $region17
    $region16: #{tpu_custom_call.1} parent=1 // pred_region
      %37 = dma.done [#allocation4], 256
    $region17: #{tpu_custom_call.1} parent=1 // pred_fallthru
      _
    // Predicated region
    $region18: #{tpu_custom_call.1} parent=1 // pred_check
      _
    $region19: #{tpu_custom_call.1} parent=1 // pred_check_branch
      %39 = sbr.rel (0) target = $region21
    $region20: #{tpu_custom_call.1} parent=1 // pred_region
      %40 = dma.done [#allocation7], 64
    $region21: #{tpu_custom_call.1} parent=1 // pred_fallthru
      _
    %p41 = scmp.eq.s32.totalorder 0, 0
    // Predicated region
    $region22: #{tpu_custom_call.1} parent=1 // pred_check
      %p42 = pneg %p41
    $region23: #{tpu_custom_call.1} parent=1 // pred_check_branch
      %44 = sbr.rel (%p42) target = $region25
    $region24: #{tpu_custom_call.1} parent=1 // pred_region
      %vm45 = vcmask 25600
      %46 = vst.msk [vmem:[#allocation2] sm:$0x3] %vm45, 0.0
    $region25: #{tpu_custom_call.1} parent=1 // pred_fallthru
      _
    %v47 = vld [vmem:[#allocation3] sm:$0xff]
    %v48 = vld [vmem:[#allocation3 + $0x8] sm:$0xff]
    %v49 = vld [vmem:[#allocation2] sm:$0x3]
    %v52 = vcombine.high %v47, %v47
    %v53 = vcombine.high %v48, %v48
    %vm56 = vcmask 1043456
    %v57 = vsel %vm56, %v47, 0.0
    %v58 = vsel %vm56, %v52, 0.0
    %v59 = vadd.f32 %v57, %v58
    %60 = vadd.xlane.f32.xlu0 %v59
    %v61 = vpop.xlane.xlu0 %60
    %v62 = vsel %vm56, %v48, 0.0
    %v63 = vsel %vm56, %v53, 0.0
    %v64 = vadd.f32 %v62, %v63
    %65 = vadd.xlane.f32.xlu0 %v64
    %v66 = vpop.xlane.xlu0 %65
    %v69 = vlaneseq
    %v70 = vand.u32 %v69, 127
    %v71 = vlaneseq
    %v72 = vshrl.u32 %v71, 7
    %v73 = vsub.s32 %v70, %v72
    %v74 = vrot.slane %v61, %v73
    %v75 = vlaneseq
    %v76 = vshrl.u32 %v75, 7
    %v77 = vsub.s32 %v70, %v76
    %v78 = vrot.slane %v66, %v77
    %vm79 = vcmask 1041409
    %v80 = vsel %vm79, %v78, %v74
    %v82 = vadd.f32 %v49, %v80
    %vm83 = vcmask 25600
    %84 = vst.msk [vmem:[#allocation2] sm:$0x3] %vm83, %v82
    // Predicated region
    $region26: #{tpu_custom_call.1} parent=1 // pred_check
      %p85 = pneg %p41
    $region27: #{tpu_custom_call.1} parent=1 // pred_check_branch
      %87 = sbr.rel (%p85) target = $region29
    $region28: #{tpu_custom_call.1} parent=1 // pred_region
      %v88 = vld [vmem:[#allocation2] sm:$0x3]
      %v89 = vmul.f32 %v88, 0.00390625
      %v90 = vld [vmem:[#allocation6] sm:$0xf]
      %v91 = vld [vmem:[%s2] sm:$0x1]
      %v93 = vlaneseq
      %v94 = vshrl.u32 %v93, 7
      %v95 = vsub.s32 0, %v94
      %v96 = vrot.slane %v91, %v95
      %99 = vset.pattern.permute.xlu0 0
      %100 = vperm.xlu0 %99, %v89
      %v101 = vpop.permute.xlu0 %100
      %v103 = vlaneseq
      %v104 = vshrl.u32 %v103, 7
      %v105 = vsub.s32 0, %v104
      %v106 = vrot.slane %v90, %v105
      %v107 = vmul.f32 %v101, %v106
      %v108 = vadd.f32 %v96, %v107
      %109 = vset.pattern.permute.xlu0 1
      %110 = vperm.xlu0 %109, %v89
      %v111 = vpop.permute.xlu0 %110
      %v113 = vlaneseq
      %v114 = vshrl.u32 %v113, 7
      %v115 = vsub.s32 1, %v114
      %v116 = vrot.slane %v90, %v115
      %v117 = vmul.f32 %v111, %v116
      %v118 = vadd.f32 %v108, %v117
      %119 = vset.pattern.permute.xlu0 2
      %120 = vperm.xlu0 %119, %v89
      %v121 = vpop.permute.xlu0 %120
      %v123 = vlaneseq
      %v124 = vshrl.u32 %v123, 7
      %v125 = vsub.s32 2, %v124
      %v126 = vrot.slane %v90, %v125
      %v127 = vmul.f32 %v121, %v126
      %v128 = vadd.f32 %v118, %v127
      %129 = vset.pattern.permute.xlu0 3
      %130 = vperm.xlu0 %129, %v89
      %v131 = vpop.permute.xlu0 %130
      %v133 = vlaneseq
      %v134 = vshrl.u32 %v133, 7
      %v135 = vsub.s32 3, %v134
      %v136 = vrot.slane %v90, %v135
      %v137 = vmul.f32 %v131, %v136
      %v138 = vadd.f32 %v128, %v137
      %139 = vst [vmem:[#allocation8] sm:$0x3] %v138
    $region29: #{tpu_custom_call.1} parent=1 // pred_fallthru
      _
    // Predicated region
    $region30: #{tpu_custom_call.1} parent=1 // pred_check
      _
    $region31: #{tpu_custom_call.1} parent=1 // pred_check_branch
      %141 = sbr.rel (0) target = $region33
    $region32: #{tpu_custom_call.1} parent=1 // pred_region
      %s143 = ssub.s32 32, 32
      %144 = vsyncadd [#allocation5], %s143
      %s146 = sshll.u32 [#allocation8], 4
      %s147 = int_to_ptr.vmem [resolvable:$true] %s146
      %149 = dma.vmem_to_hbm [thread:$0]  %s147, 32, %s3, [#allocation5]
    $region33: #{tpu_custom_call.1} parent=1 // pred_fallthru
      _
    // Predicated region
    $region34: #{tpu_custom_call.1} parent=1 // pred_check
      _
    $region35: #{tpu_custom_call.1} parent=1 // pred_check_branch
      %151 = sbr.rel (0) target = $region37
    $region36: #{tpu_custom_call.1} parent=1 // pred_region
      %152 = dma.done [#allocation5], 32
    $region37: #{tpu_custom_call.1} parent=1 // pred_fallthru
      _
    %153 = vsyncpa [#allocation4], 1
    %154 = vsyncpa [#allocation7], 1
    %155 = vsyncpa [#allocation5], 1

</llo_original>
